<compile_context>
chip_gen: v7x
topology: tpu7x:2x2x1
jax: 0.10.0
libtpu: 0.0.40
codegen_flags: <defaults>
</compile_context>

<pallas_src>
import functools
from dataclasses import dataclass

import jax
import jax.numpy as jnp
from jax.experimental import pallas as pl
from jax.experimental.pallas import tpu as pltpu


# ----------------------------------------------------------------------------
# Pallas kernel: group absmax -> per-group inverse scale -> round(x*inv) ->
#                int8 -> fp8 bit view
# ----------------------------------------------------------------------------
def _int8_group_quant_kernel(x_ref, exp_ref, qx_ref, sx_ref, *, group_size):
    x = x_ref[...].astype(jnp.float32)                 # (TR, D) lane-dense f32
    tr, d = x.shape
    ng = d // group_size

    # Per-group absmax -> (TR, ng).  This is the only step touching the
    # lane-sparse grouped layout; everything downstream stays lane-dense.
    # TODO(synk): replace with an in-lane roll-based segmented max to drop the
    # grouped relayout entirely.
    absmax = jnp.max(jnp.abs(x).reshape(tr, ng, group_size), axis=-1)

    # Scale output matches torch int8_quantize: absmax / 127 (unguarded, may
    # contain exact zeros just like the reference).
    sx_ref[...] = absmax / 127.0

    # Hoisted reciprocal on the SMALL (TR, ng) array: EUP traffic cut by G.
    # absmax == 0 -> inv = 0 -> codes = 0 (same result as the safe-scale path).
    inv = jnp.where(absmax > 0.0, 127.0 / absmax, 0.0)

    # Broadcast the per-group inverse scale back to (TR, D) on the otherwise
    # idle MXU via a constant 0/1 expander (no broadcast_to/reshape relayout).
    inv_full = jnp.dot(inv, exp_ref[...], preferred_element_type=jnp.float32)

    # Heavy elementwise path: multiply + round + clamp per element (pure VALU).
    q = jnp.clip(jnp.round(x * inv_full), -127.0, 127.0)

    # torch `.view(torch.float8_e4m3fn)` equivalent: bit reinterpretation.
    qx_ref[...] = pltpu.bitcast(q.astype(jnp.int8), jnp.float8_e4m3fn)


# ----------------------------------------------------------------------------
# Tiling / VMEM budgeting
# ----------------------------------------------------------------------------
def _vmem_capacity_bytes():
    try:
        info = pltpu.get_tpu_info()
        cap = getattr(info, "vmem_capacity_bytes", None)
        if cap:
            return int(cap)
    except Exception:
        pass
    return 64 << 20          # conservative fallback = v7x per-TC physical VMEM


def _choose_row_tile(r, d, itemsize, group_size, budget):
    ng = d // group_size
    # Conservative per-row bytes of the pipelined working set:
    #   2x double-buffered native-dtype input + 2x double-buffered fp8 output
    #   ~3 full-width f32 temporaries (upcast, inv_full, rounded q)
    #   grouped |x| intermediate, possibly lane-padded toward 128 lanes
    pad = max(1, 128 // group_size)
    per_row = d * (2 * itemsize + 3 * 4 + pad * 4 + 2 * 1) + 2 * ng * 4
    tr = max(32, int(budget // per_row) // 32 * 32)
    if r <= 32:
        return r                               # single full-extent block
    # Guarantee >= 2 grid blocks: megacore sharding on v7x + DMA/compute
    # overlap on every generation.
    return min(tr, max(32, (r // 2) // 32 * 32))


# ----------------------------------------------------------------------------
# Wrapper: flatten, build expander, pallas_call, reshape back
# ----------------------------------------------------------------------------
def qmodel_bgn_forward(x, qgroup_size, is_training=True, block_rows=None):
    if not is_training:
        return (x, None, None)

    orig_shape = x.shape
    d = int(orig_shape[-1])
    g = int(qgroup_size)
    assert d % g == 0, "last dim must be divisible by qgroup_size"
    ng = d // g

    # Keep native dtype (bf16/f32): no wrapper-side upcast -> min HBM reads.
    x2 = x.reshape(-1, d)
    r = x2.shape[0]
    itemsize = jnp.dtype(x2.dtype).itemsize

    cap = _vmem_capacity_bytes()
    vmem_limit = min(int(cap * 3 // 4), 96 << 20)
    budget = min(cap // 3, 32 << 20) - 2 * ng * d * 4   # room for the expander
    budget = max(budget, 4 << 20)

    if block_rows is None:
        tr = _choose_row_tile(r, d, itemsize, g, budget)
    else:
        tr = r if r <= int(block_rows) else int(block_rows)
    grid = (pl.cdiv(r, tr),)

    # Constant 0/1 group expander: expander[k, j] = 1.0 iff j // g == k.
    lane = jnp.arange(d, dtype=jnp.int32)
    grp = jnp.arange(ng, dtype=jnp.int32)
    expander = (lane[None, :] // g == grp[:, None]).astype(jnp.float32)

    kernel = functools.partial(_int8_group_quant_kernel, group_size=g)
    cost = pl.CostEstimate(
        flops=int(8 * r * d + 2 * r * ng * d),
        transcendentals=int(r * ng),
        bytes_accessed=int(r * d * itemsize + r * d + 4 * r * ng + 4 * ng * d),
    )

    qx_fp8, sx = pl.pallas_call(
        kernel,
        out_shape=(
            jax.ShapeDtypeStruct((r, d), jnp.float8_e4m3fn),
            jax.ShapeDtypeStruct((r, ng), jnp.float32),
        ),
        grid=grid,
        in_specs=[
            pl.BlockSpec((tr, d), lambda i: (i, 0)),
            pl.BlockSpec((ng, d), lambda i: (0, 0)),   # constant block, resident
        ],
        out_specs=(
            pl.BlockSpec((tr, d), lambda i: (i, 0)),
            # TODO(synk): ng < 128 lowers to masked stores; packing sx into a
            # lane-dense slab is a ~5-10% layout-only follow-up.
            pl.BlockSpec((tr, ng), lambda i: (i, 0)),
        ),
        compiler_params=pltpu.CompilerParams(
            dimension_semantics=("parallel",),
            vmem_limit_bytes=vmem_limit,
        ),
        cost_estimate=cost,
        # If xprof still shows exposed DMA at very large shapes, the next knob
        # is pipeline_mode=pl.Buffered(3) on the x BlockSpec (check the v7x
        # VMEM budget first).
    )(x2, expander)

    qx_fp8 = qx_fp8.reshape(orig_shape)
    sx = sx.reshape(orig_shape[:-1] + (ng,))
    return (x, qx_fp8, sx)


# ----------------------------------------------------------------------------
# Pure-JAX reference + tolerant checker
# ----------------------------------------------------------------------------
def _reference(x, g):
    shp = x.shape
    ng = shp[-1] // g
    xg = x.astype(jnp.float32).reshape(shp[:-1] + (ng, g))
    absmax = jnp.max(jnp.abs(xg), axis=-1)
    scale = absmax / 127.0
    safe = jnp.where(scale == 0.0, 1.0, scale)
    q = jnp.clip(jnp.round(xg / safe[..., None]), -128.0, 127.0).astype(jnp.int8)
    return q.reshape(shp), scale


def _check(x, out_x, qx, sx, g, tag):
    q_ref, s_ref = _reference(x, g)
    ng = x.shape[-1] // g

    assert out_x.shape == x.shape and out_x.dtype == x.dtype, f"{tag}: x meta"
    assert bool(jnp.array_equal(out_x, x)), f"{tag}: pass-through x mismatch"
    assert qx.shape == x.shape and qx.dtype == jnp.float8_e4m3fn, f"{tag}: qx meta"
    assert sx.shape == x.shape[:-1] + (ng,) and sx.dtype == jnp.float32, f"{tag}: sx meta"

    codes = jax.lax.bitcast_convert_type(qx, jnp.int8).astype(jnp.int32)
    ref = q_ref.astype(jnp.int32)
    diff = jnp.abs(codes - ref)
    max_diff = int(jnp.max(diff))
    frac_exact = float(jnp.mean((diff == 0).astype(jnp.float32)))
    # Kernel uses x * (127/absmax); reference uses x / (absmax/127).  Codes may
    # differ by 1 LSB on exact-tie quotients (e.g. bf16 x == absmax/2).
    assert max_diff <= 1, f"{tag}: code diff {max_diff} > 1 LSB"
    assert frac_exact > 0.99, f"{tag}: only {frac_exact:.4f} of codes bit-exact"
    assert bool(jnp.allclose(sx, s_ref, rtol=1e-6, atol=0.0)), f"{tag}: scales mismatch"


# ----------------------------------------------------------------------------
# Self-test
# ----------------------------------------------------------------------------
if __name__ == "__main__":
    @dataclass
    class QArgs:
        qgroup_size_non: int = 16

    qargs = QArgs()
    key = jax.random.PRNGKey(0)
    k1, k2 = jax.random.split(key)

    # --- Test 1: small f32 activation, single full-extent block ---
    B, T, C = 2, 8, 64
    x1 = jax.random.normal(k1, (B, T, C), dtype=jnp.float32)
    out_x1, qx1, sx1 = qmodel_bgn_forward(x1, qargs.qgroup_size_non)
    jax.block_until_ready((out_x1, qx1, sx1))
    _check(x1, out_x1, qx1, sx1, qargs.qgroup_size_non, "f32")

    # --- Test 2: bf16 activations, auto-tiled multi-block grid ---
    B2, T2, C2 = 2, 64, 128
    x2 = jax.random.normal(k2, (B2, T2, C2), dtype=jnp.float32).astype(jnp.bfloat16)
    out_x2, qx2, sx2 = qmodel_bgn_forward(x2, qargs.qgroup_size_non)
    jax.block_until_ready((out_x2, qx2, sx2))
    _check(x2, out_x2, qx2, sx2, qargs.qgroup_size_non, "bf16")

    # --- Test 3: bf16, explicitly small row tile (4 blocks) ---
    out_x3, qx3, sx3 = qmodel_bgn_forward(x2, qargs.qgroup_size_non, block_rows=32)
    jax.block_until_ready((out_x3, qx3, sx3))
    _check(x2, out_x3, qx3, sx3, qargs.qgroup_size_non, "bf16-tiled")

    # --- Inference mode: plain pass-through ---
    out_x4, qx4, sx4 = qmodel_bgn_forward(x1, qargs.qgroup_size_non, is_training=False)
    assert qx4 is None and sx4 is None and out_x4 is x1

    print("KERNEL_OK")
</pallas_src>

<mosaic_0001>
module attributes {stable_mosaic.version = 11 : i64} {
  func.func @_int8_group_quant_kernel(%arg0: i32, %arg1: memref<16x64xf32, #tpu.memory_space<vmem>>, %arg2: memref<4x64xf32, #tpu.memory_space<vmem>>, %arg3: memref<16x64xf8E4M3FN, #tpu.memory_space<vmem>>, %arg4: memref<16x4xf32, #tpu.memory_space<vmem>>) attributes {dimension_semantics = [#tpu.dimension_semantics<parallel>], iteration_bounds = array<i64: 1>, scalar_prefetch = 0 : i64, scratch_operands = 0 : i64, tpu.core_type = #tpu.core_type<tc>, window_params = [{transform_indices = @transform_0, window_bounds = array<i64: 16, 64>}, {pipeline_mode = #tpu.pipeline_mode<synchronous>, transform_indices = @transform_1, window_bounds = array<i64: 4, 64>}, {transform_indices = @transform_2, window_bounds = array<i64: 16, 64>}, {transform_indices = @transform_3, window_bounds = array<i64: 16, 4>}]} {
    %c0 = arith.constant 0 : index
    %c0_0 = arith.constant 0 : index
    %0 = vector.load %arg1[%c0, %c0_0] : memref<16x64xf32, #tpu.memory_space<vmem>>, vector<16x64xf32>
    %1 = math.absf %0 : vector<16x64xf32>
    %2 = vector.shape_cast %1 : vector<16x64xf32> to vector<16x4x16xf32>
    %cst = arith.constant dense<0xFF800000> : vector<16x4xf32>
    %3 = vector.multi_reduction <maximumf>, %2, %cst [2] : vector<16x4x16xf32> to vector<16x4xf32>
    %cst_1 = arith.constant 1.270000e+02 : f32
    %4 = vector.broadcast %cst_1 : f32 to vector<16x4xf32>
    %5 = arith.divf %3, %4 : vector<16x4xf32>
    %c0_2 = arith.constant 0 : index
    %c0_3 = arith.constant 0 : index
    %6 = vector.load %arg4[%c0_2, %c0_3] : memref<16x4xf32, #tpu.memory_space<vmem>>, vector<16x4xf32>
    tpu.vector_store %arg4[%c0_2, %c0_3], %5 {strides = array<i32>} : memref<16x4xf32, #tpu.memory_space<vmem>>, vector<16x4xf32>,
    %cst_4 = arith.constant 0.000000e+00 : f32
    %7 = vector.broadcast %cst_4 : f32 to vector<16x4xf32>
    %8 = arith.cmpf ogt, %3, %7 : vector<16x4xf32>
    %cst_5 = arith.constant 1.270000e+02 : f32
    %9 = vector.broadcast %cst_5 : f32 to vector<16x4xf32>
    %10 = arith.divf %9, %3 : vector<16x4xf32>
    %cst_6 = arith.constant 0.000000e+00 : f32
    %11 = vector.broadcast %cst_6 : f32 to vector<16x4xf32>
    %12 = arith.select %8, %10, %11 : vector<16x4xi1>, vector<16x4xf32>
    %c0_7 = arith.constant 0 : index
    %c0_8 = arith.constant 0 : index
    %13 = vector.load %arg2[%c0_7, %c0_8] : memref<4x64xf32, #tpu.memory_space<vmem>>, vector<4x64xf32>
    %cst_9 = arith.constant dense<0.000000e+00> : vector<16x64xf32>
    %14 = tpu.matmul %12, %13, %cst_9 {dimension_numbers = #tpu.dot_dimension_numbers<[1], [0], [0], [1], [0, 0, 1, 1], [], []>} : vector<16x4xf32>, vector<4x64xf32>, vector<16x64xf32> -> vector<16x64xf32>
    %15 = arith.mulf %0, %14 : vector<16x64xf32>
    %16 = math.roundeven %15 : vector<16x64xf32>
    %cst_10 = arith.constant -1.270000e+02 : f32
    %cst_11 = arith.constant 1.270000e+02 : f32
    %17 = vector.broadcast %cst_10 : f32 to vector<16x64xf32>
    %18 = arith.maximumf %17, %16 : vector<16x64xf32>
    %19 = vector.broadcast %cst_11 : f32 to vector<16x64xf32>
    %20 = arith.minimumf %19, %18 : vector<16x64xf32>
    %21 = arith.fptosi %20 : vector<16x64xf32> to vector<16x64xi8>
    %22 = tpu.bitcast %21 : vector<16x64xi8> -> vector<16x64xf8E4M3FN>
    %c0_12 = arith.constant 0 : index
    %c0_13 = arith.constant 0 : index
    %23 = vector.load %arg3[%c0_12, %c0_13] : memref<16x64xf8E4M3FN, #tpu.memory_space<vmem>>, vector<16x64xf8E4M3FN>
    tpu.vector_store %arg3[%c0_12, %c0_13], %22 {strides = array<i32>} : memref<16x64xf8E4M3FN, #tpu.memory_space<vmem>>, vector<16x64xf8E4M3FN>,
    return
  }
  func.func @transform_0(%arg0: i32) -> (i32, i32) {
    %c0_i32 = arith.constant 0 : i32
    %c0_i32_0 = arith.constant 0 : i32
    return %arg0, %c0_i32 : i32, i32
  }
  func.func @transform_1(%arg0: i32) -> (i32, i32) {
    %c0_i32 = arith.constant 0 : i32
    %c0_i32_0 = arith.constant 0 : i32
    %c0_i32_1 = arith.constant 0 : i32
    return %c0_i32, %c0_i32_0 : i32, i32
  }
  func.func @transform_2(%arg0: i32) -> (i32, i32) {
    %c0_i32 = arith.constant 0 : i32
    %c0_i32_0 = arith.constant 0 : i32
    return %arg0, %c0_i32 : i32, i32
  }
  func.func @transform_3(%arg0: i32) -> (i32, i32) {
    %c0_i32 = arith.constant 0 : i32
    %c0_i32_0 = arith.constant 0 : i32
    return %arg0, %c0_i32 : i32, i32
  }
}

</mosaic_0001>

<llo_original>
// kernel: tpu_custom_call.1
$region0: #{tpu_custom_call.1}
  #allocation0 [shape = 'u32[]', space=smem, size = 0x4, offset = 0x4, fixed_abs, tag = 'smem constant byte address 0x4 - core index']
  #allocation1 [shape = 'u32[144,128]{1,0:T(1,128)}', space=vmem, size = 0x12000, scoped, tag = 'internal scratch']
  %s0 = inlined_call_operand.hbm [shape: f32[16,64], index: 0, kind: input, shape index: {}]
  %s1 = inlined_call_operand.hbm [shape: f32[4,64], index: 1, kind: input, shape index: {}]
  %s2 = inlined_call_operand.hbm [shape: f8e4m3fn[16,64], index: 2, kind: output, shape index: {0}]
  %s3 = inlined_call_operand.vmem [shape: f32[16,4], index: 3, kind: output, shape index: {1}]
  %4 = xla_tuple %s2, %s3
  %s5 = sld [smem:[#allocation0]]
  $region34: #{tpu_custom_call.1} parent=0
    _
  %s7 = ssub.s32 1, %s5
  %s8 = scalar_select 0, %s7, %s5
  $region1: #{tpu_custom_call.1} parent=0
    #allocation2 [shape = 'u8[8192]{0}', space=vmem, size = 0x2000, scoped, tag = 'input window, operand 0, single buffered']
    #allocation3 [shape = 's32[1]{0}', space=sflag, size = 0x4, scoped, tag = 'scoped memory for tpu_custom_call.1']
    #allocation4 [shape = 's32[1]{0}', space=sflag, size = 0x4, scoped, tag = 'scoped memory for tpu_custom_call.1']
    #allocation5 [shape = 'u8[2048]{0}', space=vmem, size = 0x800, scoped, tag = 'input window, operand 1, single buffered']
    #allocation6 [shape = 's32[1]{0}', space=sflag, size = 0x4, scoped, tag = 'scoped memory for tpu_custom_call.1']
    #allocation7 [shape = 'u8[2048]{0}', space=vmem, size = 0x800, scoped, tag = 'output window, operand 0, single buffered']
    %9 = vsyncpa [#allocation3], 0
    %10 = vsyncpa [#allocation6], 0
    %11 = vsyncpa [#allocation4], 0
    // Predicated region
    $region2: #{tpu_custom_call.1} parent=1 // pred_check
      _
    $region3: #{tpu_custom_call.1} parent=1 // pred_check_branch
      %13 = sbr.rel (0) target = $region5
    $region4: #{tpu_custom_call.1} parent=1 // pred_region
      %s15 = ssub.s32 256, 256
      %16 = vsyncadd [#allocation3], %s15
      %s17 = sshll.u32 [#allocation2], 4
      %s18 = int_to_ptr.vmem [resolvable:$true] %s17
      %23 = dma.hbm_to_vmem [thread:$0]  %s0, 256, %s18, [#allocation3], 128, 128, 8
    $region5: #{tpu_custom_call.1} parent=1 // pred_fallthru
      _
    // Predicated region
    $region6: #{tpu_custom_call.1} parent=1 // pred_check
      _
    $region7: #{tpu_custom_call.1} parent=1 // pred_check_branch
      %25 = sbr.rel (0) target = $region9
    $region8: #{tpu_custom_call.1} parent=1 // pred_region
      %s27 = ssub.s32 64, 64
      %28 = vsyncadd [#allocation6], %s27
      %s30 = sshll.u32 [#allocation5], 4
      %s31 = int_to_ptr.vmem [resolvable:$true] %s30
      %33 = dma.hbm_to_vmem [thread:$0]  %s1, 64, %s31, [#allocation6]
    $region9: #{tpu_custom_call.1} parent=1 // pred_fallthru
      _
    // Predicated region
    $region10: #{tpu_custom_call.1} parent=1 // pred_check
      _
    $region11: #{tpu_custom_call.1} parent=1 // pred_check_branch
      %35 = sbr.rel (0) target = $region13
    $region12: #{tpu_custom_call.1} parent=1 // pred_region
      %36 = dma.done [#allocation3], 256
    $region13: #{tpu_custom_call.1} parent=1 // pred_fallthru
      _
    // Predicated region
    $region14: #{tpu_custom_call.1} parent=1 // pred_check
      _
    $region15: #{tpu_custom_call.1} parent=1 // pred_check_branch
      %38 = sbr.rel (0) target = $region17
    $region16: #{tpu_custom_call.1} parent=1 // pred_region
      %39 = dma.done [#allocation6], 64
    $region17: #{tpu_custom_call.1} parent=1 // pred_fallthru
      _
    %v40 = vld [vmem:[#allocation2] sm:$0xff]
    %v41 = vld [vmem:[#allocation2 + $0x8] sm:$0xff]
    %v42 = vand.u32 2147483647, %v40
    %v43 = vand.u32 2147483647, %v41
    %46 = vrot.lane.b32.xlu0 %v42, 112
    %v47 = vpop.permute.xlu0 %46
    %48 = vrot.lane.b32.xlu0 %v43, 112
    %v49 = vpop.permute.xlu0 %48
    %52 = vrot.lane.b32.xlu0 %v42, 96
    %v53 = vpop.permute.xlu0 %52
    %54 = vrot.lane.b32.xlu0 %v43, 96
    %v55 = vpop.permute.xlu0 %54
    %58 = vrot.lane.b32.xlu0 %v42, 80
    %v59 = vpop.permute.xlu0 %58
    %60 = vrot.lane.b32.xlu0 %v43, 80
    %v61 = vpop.permute.xlu0 %60
    %v64 = vcombine.low %v42, %v53
    %v65 = vcombine.high %v42, %v53
    %v67 = vunpack.c.l.s4 1983009808
    %v68 = vunpack.c.0.s8 %v67
    %v69 = vlaneseq
    %v70 = vshrl.u32 %v69, 7
    %v71 = vsub.s32 %v68, %v70
    %v72 = vrot.slane %v64, %v71
    %v74 = vunpack.c.l.s4 1983009808
    %v75 = vunpack.c.0.s8 %v74
    %v76 = vlaneseq
    %v77 = vshrl.u32 %v76, 7
    %v78 = vsub.s32 %v75, %v77
    %v79 = vrot.slane %v65, %v78
    %v80 = vcombine.low %v47, %v59
    %v81 = vcombine.high %v47, %v59
    %v83 = vunpack.c.l.s4 1983009808
    %v84 = vunpack.c.0.s8 %v83
    %v85 = vlaneseq
    %v86 = vshrl.u32 %v85, 7
    %v87 = vsub.s32 %v84, %v86
    %v88 = vrot.slane %v80, %v87
    %v90 = vunpack.c.l.s4 1983009808
    %v91 = vunpack.c.0.s8 %v90
    %v92 = vlaneseq
    %v93 = vshrl.u32 %v92, 7
    %v94 = vsub.s32 %v91, %v93
    %v95 = vrot.slane %v81, %v94
    %v96 = vcombine.low %v72, %v88
    %v97 = vcombine.high %v72, %v88
    %v99 = vunpack.c.l.s4 1934713408
    %v100 = vunpack.c.0.s8 %v99
    %v101 = vlaneseq
    %v102 = vshrl.u32 %v101, 7
    %v103 = vsub.s32 %v100, %v102
    %v104 = vrot.slane %v96, %v103
    %v106 = vunpack.c.l.s4 1934713408
    %v107 = vunpack.c.0.s8 %v106
    %v108 = vlaneseq
    %v109 = vshrl.u32 %v108, 7
    %v110 = vsub.s32 %v107, %v109
    %v111 = vrot.slane %v97, %v110
    %v112 = vcombine.low %v79, %v95
    %v113 = vcombine.high %v79, %v95
    %v115 = vunpack.c.l.s4 1934713408
    %v116 = vunpack.c.0.s8 %v115
    %v117 = vlaneseq
    %v118 = vshrl.u32 %v117, 7
    %v119 = vsub.s32 %v116, %v118
    %v120 = vrot.slane %v112, %v119
    %v122 = vunpack.c.l.s4 1934713408
    %v123 = vunpack.c.0.s8 %v122
    %v124 = vlaneseq
    %v125 = vshrl.u32 %v124, 7
    %v126 = vsub.s32 %v123, %v125
    %v127 = vrot.slane %v113, %v126
    %v128 = vcombine.high %v104, 0.0
    %v129 = vcombine.high %v111, 0.0
    %v130 = vcombine.high %v120, 0.0
    %v131 = vcombine.high %v127, 0.0
    %v132 = vcombine.low %v43, %v55
    %v133 = vcombine.high %v43, %v55
    %v135 = vunpack.c.l.s4 1983009808
    %v136 = vunpack.c.0.s8 %v135
    %v137 = vlaneseq
    %v138 = vshrl.u32 %v137, 7
    %v139 = vsub.s32 %v136, %v138
    %v140 = vrot.slane %v132, %v139
    %v142 = vunpack.c.l.s4 1983009808
    %v143 = vunpack.c.0.s8 %v142
    %v144 = vlaneseq
    %v145 = vshrl.u32 %v144, 7
    %v146 = vsub.s32 %v143, %v145
    %v147 = vrot.slane %v133, %v146
    %v148 = vcombine.low %v49, %v61
    %v149 = vcombine.high %v49, %v61
    %v151 = vunpack.c.l.s4 1983009808
    %v152 = vunpack.c.0.s8 %v151
    %v153 = vlaneseq
    %v154 = vshrl.u32 %v153, 7
    %v155 = vsub.s32 %v152, %v154
    %v156 = vrot.slane %v148, %v155
    %v158 = vunpack.c.l.s4 1983009808
    %v159 = vunpack.c.0.s8 %v158
    %v160 = vlaneseq
    %v161 = vshrl.u32 %v160, 7
    %v162 = vsub.s32 %v159, %v161
    %v163 = vrot.slane %v149, %v162
    %v164 = vcombine.low %v140, %v156
    %v165 = vcombine.high %v140, %v156
    %v167 = vunpack.c.l.s4 1934713408
    %v168 = vunpack.c.0.s8 %v167
    %v169 = vlaneseq
    %v170 = vshrl.u32 %v169, 7
    %v171 = vsub.s32 %v168, %v170
    %v172 = vrot.slane %v164, %v171
    %v174 = vunpack.c.l.s4 1934713408
    %v175 = vunpack.c.0.s8 %v174
    %v176 = vlaneseq
    %v177 = vshrl.u32 %v176, 7
    %v178 = vsub.s32 %v175, %v177
    %v179 = vrot.slane %v165, %v178
    %v180 = vcombine.low %v147, %v163
    %v181 = vcombine.high %v147, %v163
    %v183 = vunpack.c.l.s4 1934713408
    %v184 = vunpack.c.0.s8 %v183
    %v185 = vlaneseq
    %v186 = vshrl.u32 %v185, 7
    %v187 = vsub.s32 %v184, %v186
    %v188 = vrot.slane %v180, %v187
    %v190 = vunpack.c.l.s4 1934713408
    %v191 = vunpack.c.0.s8 %v190
    %v192 = vlaneseq
    %v193 = vshrl.u32 %v192, 7
    %v194 = vsub.s32 %v191, %v193
    %v195 = vrot.slane %v181, %v194
    %v196 = vcombine.high %v172, 0.0
    %v197 = vcombine.high %v179, 0.0
    %v198 = vcombine.high %v188, 0.0
    %v199 = vcombine.high %v195, 0.0
    %vm200 = vcmask 125952
    %v201 = vsel %vm200, %v104, -inf
    %202 = vmax.xlane.f32.xlu0 %v201
    %v203 = vpop.xlane.xlu0 %202
    %v204 = vsel %vm200, %v128, -inf
    %205 = vmax.xlane.f32.xlu0 %v204
    %v206 = vpop.xlane.xlu0 %205
    %v207 = vsel %vm200, %v111, -inf
    %208 = vmax.xlane.f32.xlu0 %v207
    %v209 = vpop.xlane.xlu0 %208
    %v210 = vsel %vm200, %v129, -inf
    %211 = vmax.xlane.f32.xlu0 %v210
    %v212 = vpop.xlane.xlu0 %211
    %v213 = vsel %vm200, %v120, -inf
    %214 = vmax.xlane.f32.xlu0 %v213
    %v215 = vpop.xlane.xlu0 %214
    %v216 = vsel %vm200, %v130, -inf
    %217 = vmax.xlane.f32.xlu0 %v216
    %v218 = vpop.xlane.xlu0 %217
    %v219 = vsel %vm200, %v127, -inf
    %220 = vmax.xlane.f32.xlu0 %v219
    %v221 = vpop.xlane.xlu0 %220
    %v222 = vsel %vm200, %v131, -inf
    %223 = vmax.xlane.f32.xlu0 %v222
    %v224 = vpop.xlane.xlu0 %223
    %v225 = vsel %vm200, %v172, -inf
    %226 = vmax.xlane.f32.xlu0 %v225
    %v227 = vpop.xlane.xlu0 %226
    %v228 = vsel %vm200, %v196, -inf
    %229 = vmax.xlane.f32.xlu0 %v228
    %v230 = vpop.xlane.xlu0 %229
    %v231 = vsel %vm200, %v179, -inf
    %232 = vmax.xlane.f32.xlu0 %v231
    %v233 = vpop.xlane.xlu0 %232
    %v234 = vsel %vm200, %v197, -inf
    %235 = vmax.xlane.f32.xlu0 %v234
    %v236 = vpop.xlane.xlu0 %235
    %v237 = vsel %vm200, %v188, -inf
    %238 = vmax.xlane.f32.xlu0 %v237
    %v239 = vpop.xlane.xlu0 %238
    %v240 = vsel %vm200, %v198, -inf
    %241 = vmax.xlane.f32.xlu0 %v240
    %v242 = vpop.xlane.xlu0 %241
    %v243 = vsel %vm200, %v195, -inf
    %244 = vmax.xlane.f32.xlu0 %v243
    %v245 = vpop.xlane.xlu0 %244
    %v246 = vsel %vm200, %v199, -inf
    %247 = vmax.xlane.f32.xlu0 %v246
    %v248 = vpop.xlane.xlu0 %247
    %v249 = vrcp.pop 127.0
    %v250 = vmul.f32 %v203, %v249
    %v251 = vmul.f32 %v206, %v249
    %v252 = vmul.f32 %v209, %v249
    %v253 = vmul.f32 %v212, %v249
    %v254 = vmul.f32 %v215, %v249
    %v255 = vmul.f32 %v218, %v249
    %v256 = vmul.f32 %v221, %v249
    %v257 = vmul.f32 %v224, %v249
    %v258 = vmul.f32 %v227, %v249
    %v259 = vmul.f32 %v230, %v249
    %v260 = vmul.f32 %v233, %v249
    %v261 = vmul.f32 %v236, %v249
    %v262 = vmul.f32 %v239, %v249
    %v263 = vmul.f32 %v242, %v249
    %v264 = vmul.f32 %v245, %v249
    %v265 = vmul.f32 %v248, %v249
    %v282 = vlaneseq
    %v283 = vand.u32 %v282, 127
    %v284 = vlaneseq
    %v285 = vshrl.u32 %v284, 7
    %v286 = vsub.s32 %v283, %v285
    %v287 = vrot.slane %v250, %v286
    %v288 = vlaneseq
    %v289 = vshrl.u32 %v288, 7
    %v290 = vsub.s32 %v283, %v289
    %v291 = vrot.slane %v251, %v290
    %v292 = vlaneseq
    %v293 = vshrl.u32 %v292, 7
    %v294 = vsub.s32 %v283, %v293
    %v295 = vrot.slane %v252, %v294
    %v296 = vlaneseq
    %v297 = vshrl.u32 %v296, 7
    %v298 = vsub.s32 %v283, %v297
    %v299 = vrot.slane %v253, %v298
    %v300 = vlaneseq
    %v301 = vshrl.u32 %v300, 7
    %v302 = vsub.s32 %v283, %v301
    %v303 = vrot.slane %v254, %v302
    %v304 = vlaneseq
    %v305 = vshrl.u32 %v304, 7
    %v306 = vsub.s32 %v283, %v305
    %v307 = vrot.slane %v255, %v306
    %v308 = vlaneseq
    %v309 = vshrl.u32 %v308, 7
    %v310 = vsub.s32 %v283, %v309
    %v311 = vrot.slane %v256, %v310
    %v312 = vlaneseq
    %v313 = vshrl.u32 %v312, 7
    %v314 = vsub.s32 %v283, %v313
    %v315 = vrot.slane %v257, %v314
    %v316 = vlaneseq
    %v317 = vshrl.u32 %v316, 7
    %v318 = vsub.s32 %v283, %v317
    %v319 = vrot.slane %v258, %v318
    %v320 = vlaneseq
    %v321 = vshrl.u32 %v320, 7
    %v322 = vsub.s32 %v283, %v321
    %v323 = vrot.slane %v259, %v322
    %v324 = vlaneseq
    %v325 = vshrl.u32 %v324, 7
    %v326 = vsub.s32 %v283, %v325
    %v327 = vrot.slane %v260, %v326
    %v328 = vlaneseq
    %v329 = vshrl.u32 %v328, 7
    %v330 = vsub.s32 %v283, %v329
    %v331 = vrot.slane %v261, %v330
    %v332 = vlaneseq
    %v333 = vshrl.u32 %v332, 7
    %v334 = vsub.s32 %v283, %v333
    %v335 = vrot.slane %v262, %v334
    %v336 = vlaneseq
    %v337 = vshrl.u32 %v336, 7
    %v338 = vsub.s32 %v283, %v337
    %v339 = vrot.slane %v263, %v338
    %v340 = vlaneseq
    %v341 = vshrl.u32 %v340, 7
    %v342 = vsub.s32 %v283, %v341
    %v343 = vrot.slane %v264, %v342
    %v344 = vlaneseq
    %v345 = vshrl.u32 %v344, 7
    %v346 = vsub.s32 %v283, %v345
    %v347 = vrot.slane %v265, %v346
    %vm348 = vcmask 1041409
    %v349 = vsel %vm348, %v291, %v287
    %vm350 = vcmask 1042434
    %v351 = vsel %vm350, %v295, %v349
    %vm352 = vcmask 1043459
    %v353 = vsel %vm352, %v299, %v351
    %vm354 = vcmask 1044484
    %v355 = vsel %vm354, %v303, %v353
    %vm356 = vcmask 1045509
    %v357 = vsel %vm356, %v307, %v355
    %vm358 = vcmask 1046534
    %v359 = vsel %vm358, %v311, %v357
    %vm360 = vcmask 1047559
    %v361 = vsel %vm360, %v315, %v359
    %v362 = vsel %vm348, %v323, %v319
    %v363 = vsel %vm350, %v327, %v362
    %v364 = vsel %vm352, %v331, %v363
    %v365 = vsel %vm354, %v335, %v364
    %v366 = vsel %vm356, %v339, %v365
    %v367 = vsel %vm358, %v343, %v366
    %v368 = vsel %vm360, %v347, %v367
    %vm371 = vcmask 31744
    %372 = vst.msk [vmem:[%s3] sm:$0xff] %vm371, %v361
    %373 = vst.msk [vmem:[%s3 + $0x8] sm:$0xff] %vm371, %v368
    %vm374 = vcmp.gt.f32.partialorder %v203, 0.0
    %vm375 = vcmp.gt.f32.partialorder %v206, 0.0
    %vm376 = vcmp.gt.f32.partialorder %v209, 0.0
    %vm377 = vcmp.gt.f32.partialorder %v212, 0.0
    %vm378 = vcmp.gt.f32.partialorder %v215, 0.0
    %vm379 = vcmp.gt.f32.partialorder %v218, 0.0
    %vm380 = vcmp.gt.f32.partialorder %v221, 0.0
    %vm381 = vcmp.gt.f32.partialorder %v224, 0.0
    %vm382 = vcmp.gt.f32.partialorder %v227, 0.0
    %vm383 = vcmp.gt.f32.partialorder %v230, 0.0
    %vm384 = vcmp.gt.f32.partialorder %v233, 0.0
    %vm385 = vcmp.gt.f32.partialorder %v236, 0.0
    %vm386 = vcmp.gt.f32.partialorder %v239, 0.0
    %vm387 = vcmp.gt.f32.partialorder %v242, 0.0
    %vm388 = vcmp.gt.f32.partialorder %v245, 0.0
    %vm389 = vcmp.gt.f32.partialorder %v248, 0.0
    %v390 = vrcp.pop %v203
    %v391 = vmul.f32 127.0, %v390
    %v392 = vrcp.pop %v206
    %v393 = vmul.f32 127.0, %v392
    %v394 = vrcp.pop %v209
    %v395 = vmul.f32 127.0, %v394
    %v396 = vrcp.pop %v212
    %v397 = vmul.f32 127.0, %v396
    %v398 = vrcp.pop %v215
    %v399 = vmul.f32 127.0, %v398
    %v400 = vrcp.pop %v218
    %v401 = vmul.f32 127.0, %v400
    %v402 = vrcp.pop %v221
    %v403 = vmul.f32 127.0, %v402
    %v404 = vrcp.pop %v224
    %v405 = vmul.f32 127.0, %v404
    %v406 = vrcp.pop %v227
    %v407 = vmul.f32 127.0, %v406
    %v408 = vrcp.pop %v230
    %v409 = vmul.f32 127.0, %v408
    %v410 = vrcp.pop %v233
    %v411 = vmul.f32 127.0, %v410
    %v412 = vrcp.pop %v236
    %v413 = vmul.f32 127.0, %v412
    %v414 = vrcp.pop %v239
    %v415 = vmul.f32 127.0, %v414
    %v416 = vrcp.pop %v242
    %v417 = vmul.f32 127.0, %v416
    %v418 = vrcp.pop %v245
    %v419 = vmul.f32 127.0, %v418
    %v420 = vrcp.pop %v248
    %v421 = vmul.f32 127.0, %v420
    %v422 = vsel %vm374, %v391, 0.0
    %v423 = vsel %vm375, %v393, 0.0
    %v424 = vsel %vm376, %v395, 0.0
    %v425 = vsel %vm377, %v397, 0.0
    %v426 = vsel %vm378, %v399, 0.0
    %v427 = vsel %vm379, %v401, 0.0
    %v428 = vsel %vm380, %v403, 0.0
    %v429 = vsel %vm381, %v405, 0.0
    %v430 = vsel %vm382, %v407, 0.0
    %v431 = vsel %vm383, %v409, 0.0
    %v432 = vsel %vm384, %v411, 0.0
    %v433 = vsel %vm385, %v413, 0.0
    %v434 = vsel %vm386, %v415, 0.0
    %v435 = vsel %vm387, %v417, 0.0
    %v436 = vsel %vm388, %v419, 0.0
    %v437 = vsel %vm389, %v421, 0.0
    %v438 = vld [vmem:[#allocation5] sm:$0xf]
    %v455 = vlaneseq
    %v456 = vshrl.u32 %v455, 7
    %v457 = vsub.s32 %v283, %v456
    %v458 = vrot.slane %v422, %v457
    %v459 = vlaneseq
    %v460 = vshrl.u32 %v459, 7
    %v461 = vsub.s32 %v283, %v460
    %v462 = vrot.slane %v423, %v461
    %v463 = vlaneseq
    %v464 = vshrl.u32 %v463, 7
    %v465 = vsub.s32 %v283, %v464
    %v466 = vrot.slane %v424, %v465
    %v467 = vlaneseq
    %v468 = vshrl.u32 %v467, 7
    %v469 = vsub.s32 %v283, %v468
    %v470 = vrot.slane %v425, %v469
    %v471 = vlaneseq
    %v472 = vshrl.u32 %v471, 7
    %v473 = vsub.s32 %v283, %v472
    %v474 = vrot.slane %v426, %v473
    %v475 = vlaneseq
    %v476 = vshrl.u32 %v475, 7
    %v477 = vsub.s32 %v283, %v476
    %v478 = vrot.slane %v427, %v477
    %v479 = vlaneseq
    %v480 = vshrl.u32 %v479, 7
    %v481 = vsub.s32 %v283, %v480
    %v482 = vrot.slane %v428, %v481
    %v483 = vlaneseq
    %v484 = vshrl.u32 %v483, 7
    %v485 = vsub.s32 %v283, %v484
    %v486 = vrot.slane %v429, %v485
    %v487 = vlaneseq
    %v488 = vshrl.u32 %v487, 7
    %v489 = vsub.s32 %v283, %v488
    %v490 = vrot.slane %v430, %v489
    %v491 = vlaneseq
    %v492 = vshrl.u32 %v491, 7
    %v493 = vsub.s32 %v283, %v492
    %v494 = vrot.slane %v431, %v493
    %v495 = vlaneseq
    %v496 = vshrl.u32 %v495, 7
    %v497 = vsub.s32 %v283, %v496
    %v498 = vrot.slane %v432, %v497
    %v499 = vlaneseq
    %v500 = vshrl.u32 %v499, 7
    %v501 = vsub.s32 %v283, %v500
    %v502 = vrot.slane %v433, %v501
    %v503 = vlaneseq
    %v504 = vshrl.u32 %v503, 7
    %v505 = vsub.s32 %v283, %v504
    %v506 = vrot.slane %v434, %v505
    %v507 = vlaneseq
    %v508 = vshrl.u32 %v507, 7
    %v509 = vsub.s32 %v283, %v508
    %v510 = vrot.slane %v435, %v509
    %v511 = vlaneseq
    %v512 = vshrl.u32 %v511, 7
    %v513 = vsub.s32 %v283, %v512
    %v514 = vrot.slane %v436, %v513
    %v515 = vlaneseq
    %v516 = vshrl.u32 %v515, 7
    %v517 = vsub.s32 %v283, %v516
    %v518 = vrot.slane %v437, %v517
    %v519 = vsel %vm348, %v462, %v458
    %v520 = vsel %vm350, %v466, %v519
    %v521 = vsel %vm352, %v470, %v520
    %v522 = vsel %vm354, %v474, %v521
    %v523 = vsel %vm356, %v478, %v522
    %v524 = vsel %vm358, %v482, %v523
    %v525 = vsel %vm360, %v486, %v524
    %v526 = vsel %vm348, %v494, %v490
    %v527 = vsel %vm350, %v498, %v526
    %v528 = vsel %vm352, %v502, %v527
    %v529 = vsel %vm354, %v506, %v528
    %v530 = vsel %vm356, %v510, %v529
    %v531 = vsel %vm358, %v514, %v530
    %v532 = vsel %vm360, %v518, %v531
    %v533 = vsel %vm371, %v525, 0
    %v535 = vsel %vm371, %v532, 0
    %vm537 = vcmask 1043456
    %v539 = vsel %vm537, %v438, 0
    %541 = vmatprep.subr.mxu0 0.0
    %542 = vmatpush1.msra.mxu0 %v539
    %543 = vmatprep.subr.mxu0 0.0
    %544 = vmatpush1.msra.mxu0 0.0
    %545 = vmatprep.subr.mxu0 0.0
    %546 = vmatpush1.msra.mxu0 0.0
    %547 = vmatprep.subr.mxu0 0.0
    %548 = vmatpush1.msra.mxu0 0.0
    %549 = vmatprep.subr.mxu0 0.0
    %550 = vmatpush1.msra.mxu0 0.0
    %551 = vmatprep.subr.mxu0 0.0
    %552 = vmatpush1.msra.mxu0 0.0
    %553 = vmatprep.subr.mxu0 0.0
    %554 = vmatpush1.msra.mxu0 0.0
    %555 = vmatprep.subr.mxu0 0.0
    %556 = vmatpush1.msra.mxu0 0.0
    %557 = vmatprep.subr.mxu0 0.0
    %558 = vmatpush1.msra.mxu0 0.0
    %559 = vmatprep.subr.mxu0 0.0
    %560 = vmatpush1.msra.mxu0 0.0
    %561 = vmatprep.subr.mxu0 0.0
    %562 = vmatpush1.msra.mxu0 0.0
    %563 = vmatprep.subr.mxu0 0.0
    %564 = vmatpush1.msra.mxu0 0.0
    %565 = vmatprep.subr.mxu0 0.0
    %566 = vmatpush1.msra.mxu0 0.0
    %567 = vmatprep.subr.mxu0 0.0
    %568 = vmatpush1.msra.mxu0 0.0
    %569 = vmatprep.subr.mxu0 0.0
    %570 = vmatpush1.msra.mxu0 0.0
    %571 = vmatprep.subr.mxu0 0.0
    %572 = vmatpush1.msra.mxu0 0.0
    %573 = vmatprep.subr.mxu0 0.0
    %574 = vmatpush1.msra.mxu0 0.0
    %575 = vmatprep.subr.mxu0 0.0
    %576 = vmatpush1.msra.mxu0 0.0
    %577 = vmatprep.subr.mxu0 0.0
    %578 = vmatpush1.msra.mxu0 0.0
    %579 = vmatprep.subr.mxu0 0.0
    %580 = vmatpush1.msra.mxu0 0.0
    %581 = vmatprep.subr.mxu0 0.0
    %582 = vmatpush1.msra.mxu0 0.0
    %583 = vmatprep.subr.mxu0 0.0
    %584 = vmatpush1.msra.mxu0 0.0
    %585 = vmatprep.subr.mxu0 0.0
    %586 = vmatpush1.msra.mxu0 0.0
    %587 = vmatprep.subr.mxu0 0.0
    %588 = vmatpush1.msra.mxu0 0.0
    %589 = vmatprep.subr.mxu0 0.0
    %590 = vmatpush1.msra.mxu0 0.0
    %591 = vmatprep.subr.mxu0 0.0
    %592 = vmatpush1.msra.mxu0 0.0
    %593 = vmatprep.subr.mxu0 0.0
    %594 = vmatpush1.msra.mxu0 0.0
    %595 = vmatprep.subr.mxu0 0.0
    %596 = vmatpush1.msra.mxu0 0.0
    %597 = vmatprep.subr.mxu0 0.0
    %598 = vmatpush1.msra.mxu0 0.0
    %599 = vmatprep.subr.mxu0 0.0
    %600 = vmatpush1.msra.mxu0 0.0
    %601 = vmatprep.subr.mxu0 0.0
    %602 = vmatpush1.msra.mxu0 0.0
    %603 = vmatprep.subr.mxu0 0.0
    %604 = vmatpush1.msra.mxu0 0.0
    %605 = vmatprep.mubr.f32.mxu0 0.0
    %606 = vmatmul.mubr.f32.gmra.mrb[0].mxu0 %v533
    %v607 = vpop.f32.mrb[0].mxu0
    %v608 = vadd.f32 0.0, %v607
    %v609 = vpop.f32.mrb[0].mxu0
    %610 = vmatprep.mubr.f32.mxu0 0.0
    %611 = vmatmul.mubr.f32.gmra.mrb[0].mxu0 %v535
    %v612 = vpop.f32.mrb[0].mxu0
    %v613 = vadd.f32 0.0, %v612
    %v614 = vpop.f32.mrb[0].mxu0
    %615 = vdwg.mxu0
    %v616 = vmul.f32 %v40, %v608
    %v617 = vmul.f32 %v41, %v613
    %v618 = vround.ne.pseudo %v616
    %v619 = vround.ne.pseudo %v617
    %v620 = vmax.f32 %v618, -127.0
    %v621 = vmax.f32 %v619, -127.0
    %v622 = vmin.f32 %v620, 127.0
    %v623 = vmin.f32 %v621, 127.0
    %v624 = vtrunc.f32 %v622
    %v625 = vtrunc.f32 %v623
    %v626 = vpack.c.f32.eXmY %v624, %v625, 312
    %v630 = vpack.c.b8 %v626, %v626
    %v632 = vunpack.c.0.s8 %v630
    %v633 = vunpack.c.1.s8 %v630
    %v634 = vpack.c.b16 %v632, %v632
    %v635 = vpack.c.b8 %v634, %v634
    %v636 = vpack.c.b16 %v633, %v633
    %v637 = vpack.c.b8 %v636, %v636
    %vm640 = vcmask 517120
    %641 = vst.msk [vmem:[#allocation7] sm:$0x3] %vm640, %v635
    %642 = vst.msk [vmem:[#allocation7 + $0x2] sm:$0x3] %vm640, %v637
    // Predicated region
    $region18: #{tpu_custom_call.1} parent=1 // pred_check
      _
    $region19: #{tpu_custom_call.1} parent=1 // pred_check_branch
      %644 = sbr.rel (0) target = $region21
    $region20: #{tpu_custom_call.1} parent=1 // pred_region
      %s646 = ssub.s32 64, 64
      %647 = vsyncadd [#allocation4], %s646
      %s648 = sshll.u32 [#allocation7], 4
      %s649 = int_to_ptr.vmem [resolvable:$true] %s648
      %654 = dma.vmem_to_hbm [thread:$0]  %s649, 64, %s2, [#allocation4], 32, 32, 2
    $region21: #{tpu_custom_call.1} parent=1 // pred_fallthru
      _
    // Predicated region
    $region22: #{tpu_custom_call.1} parent=1 // pred_check
      _
    $region23: #{tpu_custom_call.1} parent=1 // pred_check_branch
      %656 = sbr.rel (0) target = $region25
    $region24: #{tpu_custom_call.1} parent=1 // pred_region
      _
    $region25: #{tpu_custom_call.1} parent=1 // pred_fallthru
      _
    // Predicated region
    $region26: #{tpu_custom_call.1} parent=1 // pred_check
      _
    $region27: #{tpu_custom_call.1} parent=1 // pred_check_branch
      %658 = sbr.rel (0) target = $region29
    $region28: #{tpu_custom_call.1} parent=1 // pred_region
      %659 = dma.done [#allocation4], 64
    $region29: #{tpu_custom_call.1} parent=1 // pred_fallthru
      _
    // Predicated region
    $region30: #{tpu_custom_call.1} parent=1 // pred_check
      _
    $region31: #{tpu_custom_call.1} parent=1 // pred_check_branch
      %661 = sbr.rel (0) target = $region33
    $region32: #{tpu_custom_call.1} parent=1 // pred_region
      _
    $region33: #{tpu_custom_call.1} parent=1 // pred_fallthru
      _
    %662 = vsyncpa [#allocation3], 1
    %663 = vsyncpa [#allocation6], 1
    %664 = vsyncpa [#allocation4], 1

</llo_original>
